<compile_context>
chip_gen: v5e
topology: v5e:2x2
jax: 0.10.0
libtpu: 0.0.40
codegen_flags: <defaults>
</compile_context>

<pallas_src>
import jax
import jax.numpy as jnp
from jax import lax
from jax.experimental import pallas as pl
from jax.experimental.pallas import tpu as pltpu


def _mlp_kernel(x_ref, w1_ref, b1_ref, w2_ref, b2_ref, o_ref):
    # In-kernel cast of the streamed x tile (free: hides under the x DMA).
    x = x_ref[...].astype(w1_ref.dtype)
    # Hidden layer on the MXU, f32 accumulation: (tb, in) @ (in, hidden).
    h = jnp.dot(x, w1_ref[...], preferred_element_type=jnp.float32)
    h = jnp.maximum(h + b1_ref[...], 0.0)                 # f32 bias + ReLU (VPU)
    # Output layer, lane-dense: (out, hidden) x (tb, hidden) -> (out, tb).
    z = lax.dot_general(
        w2_ref[...], h.astype(w2_ref.dtype),
        dimension_numbers=(((1,), (1,)), ((), ())),
        preferred_element_type=jnp.float32)
    z = z + b2_ref[...]                                   # f32 bias, (out, 1) bcast
    o_ref[...] = jax.nn.sigmoid(z).astype(o_ref.dtype)    # EUP sigmoid, lane-dense


def _padded_bytes(rows, cols, itemsize):
    """VMEM footprint of a (rows, cols) buffer with lane/sublane padding."""
    sub = 8 * (4 // itemsize) if itemsize < 4 else 8      # sublane tile (packed dtypes)
    r = -(-rows // sub) * sub
    c = -(-cols // 128) * 128
    return r * c * itemsize


def customer_purchase_net(x, w1, b1, w2, b2, *,
                          block_batch=8192, compute_dtype=jnp.bfloat16):
    """Forward pass of CustomerPurchaseNet as a single fused Pallas kernel.

    x  : (B, input_size)          float
    w1 : (hidden, input_size)     float   (PyTorch nn.Linear weight layout)
    b1 : (hidden,)                float
    w2 : (output, hidden)         float
    b2 : (output,)                float
    returns (B, output) float32 purchase probabilities.
    """
    B, in_size = x.shape
    hidden = w1.shape[0]
    out_size = w2.shape[0]

    # x stays in its original dtype (cast happens inside the kernel).
    w1_t = jnp.asarray(w1, compute_dtype).T                   # (in, hidden)
    w2_c = jnp.asarray(w2, compute_dtype)                     # (out, hidden)
    b1_2d = jnp.asarray(b1, jnp.float32).reshape(1, hidden)
    b2_2d = jnp.asarray(b2, jnp.float32).reshape(out_size, 1)

    x_bpe = jnp.dtype(x.dtype).itemsize
    c_bpe = jnp.dtype(compute_dtype).itemsize

    # ---- VMEM accounting (padded layout, incl. live intermediates) --------
    def _vmem_bytes(t):
        return (2 * _padded_bytes(t, in_size, x_bpe)           # x tile, dbl-buffered
                + 2 * _padded_bytes(out_size, t, 4)            # out tile, dbl-buffered
                + _padded_bytes(t, in_size, c_bpe)             # in-kernel x cast
                + _padded_bytes(t, hidden, 4)                  # h (f32)
                + _padded_bytes(t, hidden, c_bpe)              # h cast for layer 2
                + _padded_bytes(in_size, hidden, c_bpe)        # W1^T (resident)
                + _padded_bytes(out_size, hidden, c_bpe)       # W2   (resident)
                + _padded_bytes(1, hidden, 4)                  # b1
                + _padded_bytes(out_size, 1, 4))               # b2

    # Budget: v7x has 64 MiB VMEM per TC; v5e/v6e have 128 MiB.
    try:
        info = pltpu.get_tpu_info()
        vmem_cap = int(getattr(info, "vmem_capacity_bytes", 64 * 1024 * 1024))
    except Exception:
        vmem_cap = 64 * 1024 * 1024
    if vmem_cap >= 128 * 1024 * 1024:
        budget, limit_cap = 96 * 1024 * 1024, 100 * 1024 * 1024
    else:
        budget, limit_cap = 40 * 1024 * 1024, 48 * 1024 * 1024

    # ---- batch-tile selection ---------------------------------------------
    LANE = 128
    tb = min(int(block_batch), B)
    if tb < B:
        # Lane-dense output block (out, tb) requires tb % 128 == 0 (also
        # satisfies the sublane constraint on the (tb, in) x block).
        tb = max(LANE, (tb // LANE) * LANE)
    while tb > LANE and tb < B and _vmem_bytes(tb) > budget:
        tb = max(LANE, ((tb // 2) // LANE) * LANE)
    # Keep >= 2 grid steps for large batches so v7x's 2nd TensorCore has work.
    if tb >= B and B >= 2 * LANE:
        tb = -(-(-(-B // 2)) // LANE) * LANE               # ceil(ceil(B/2)/128)*128

    grid = (pl.cdiv(B, tb),)
    vmem_limit = int(min(max(_vmem_bytes(tb) * 3 // 2, 32 * 1024 * 1024),
                         limit_cap))

    out_2d = pl.pallas_call(
        _mlp_kernel,
        out_shape=jax.ShapeDtypeStruct((out_size, B), jnp.float32),
        grid_spec=pltpu.PrefetchScalarGridSpec(
            num_scalar_prefetch=0,
            grid=grid,
            in_specs=[
                pl.BlockSpec((tb, in_size), lambda i: (i, 0)),        # x tile (streamed)
                pl.BlockSpec((in_size, hidden), lambda i: (0, 0)),    # W1^T (resident)
                pl.BlockSpec((1, hidden), lambda i: (0, 0)),          # b1   (resident)
                pl.BlockSpec((out_size, hidden), lambda i: (0, 0)),   # W2   (resident)
                pl.BlockSpec((out_size, 1), lambda i: (0, 0)),        # b2   (resident)
            ],
            out_specs=pl.BlockSpec((out_size, tb), lambda i: (0, i)), # lane-dense out
        ),
        compiler_params=pltpu.CompilerParams(
            dimension_semantics=("parallel",),   # batch axis: megacore-shardable
            vmem_limit_bytes=vmem_limit,
        ),
    )(x, w1_t, b1_2d, w2_c, b2_2d)

    return jnp.transpose(out_2d)                 # (B, out_size), f32


def _reference(x, w1, b1, w2, b2):
    h = jnp.maximum(x @ w1.T + b1, 0.0)
    return jax.nn.sigmoid(h @ w2.T + b2)


if __name__ == "__main__":
    # Small shapes consistent with the module's forward.
    input_size, hidden_size, output_size = 16, 32, 1

    key = jax.random.PRNGKey(0)
    kx, kw1, kb1, kw2, kb2, kx2 = jax.random.split(key, 6)

    # Deterministic parameter init (Kaiming-uniform-ish scale, like nn.Linear).
    w1 = jax.random.uniform(kw1, (hidden_size, input_size), jnp.float32,
                            -1.0 / (input_size ** 0.5), 1.0 / (input_size ** 0.5))
    b1 = jax.random.uniform(kb1, (hidden_size,), jnp.float32,
                            -1.0 / (input_size ** 0.5), 1.0 / (input_size ** 0.5))
    w2 = jax.random.uniform(kw2, (output_size, hidden_size), jnp.float32,
                            -1.0 / (hidden_size ** 0.5), 1.0 / (hidden_size ** 0.5))
    b2 = jax.random.uniform(kb2, (output_size,), jnp.float32,
                            -1.0 / (hidden_size ** 0.5), 1.0 / (hidden_size ** 0.5))

    # --- test 1: tiny batch, f32 path (tight tolerance) --------------------
    x_small = jax.random.normal(kx, (8, input_size), dtype=jnp.float32)
    out_f32 = jax.block_until_ready(
        customer_purchase_net(x_small, w1, b1, w2, b2,
                              compute_dtype=jnp.float32))
    ref_small = _reference(x_small, w1, b1, w2, b2)
    assert out_f32.shape == (8, output_size)
    assert jnp.allclose(out_f32, ref_small, atol=1e-5, rtol=1e-5), \
        "f32 mismatch vs reference"

    # --- test 2: multi-tile batch (ragged last block), bf16 path -----------
    x_big = jax.random.normal(kx2, (2000, input_size), dtype=jnp.float32)
    out_bf16 = jax.block_until_ready(
        customer_purchase_net(x_big, w1, b1, w2, b2, block_batch=512))
    ref_big = _reference(x_big, w1, b1, w2, b2)
    assert out_bf16.shape == (2000, output_size)
    assert jnp.allclose(out_bf16, ref_big, atol=3e-2, rtol=3e-2), \
        "bf16 mismatch vs reference"

    # --- test 3: large-batch default-tile path (grid split, big tb) --------
    x_huge = jax.random.normal(kx, (9000, input_size), dtype=jnp.float32)
    out_huge = jax.block_until_ready(
        customer_purchase_net(x_huge, w1, b1, w2, b2))
    ref_huge = _reference(x_huge, w1, b1, w2, b2)
    assert out_huge.shape == (9000, output_size)
    assert jnp.allclose(out_huge, ref_huge, atol=3e-2, rtol=3e-2), \
        "bf16 (large batch) mismatch vs reference"

    print("KERNEL_OK")
</pallas_src>

<mosaic_0001>
module attributes {stable_mosaic.version = 11 : i64} {
  func.func @_mlp_kernel(%arg0: i32, %arg1: memref<8x16xf32, #tpu.memory_space<vmem>>, %arg2: memref<16x32xf32, #tpu.memory_space<vmem>>, %arg3: memref<1x32xf32, #tpu.memory_space<vmem>>, %arg4: memref<1x32xf32, #tpu.memory_space<vmem>>, %arg5: memref<1x1xf32, #tpu.memory_space<vmem>>, %arg6: memref<1x8xf32, #tpu.memory_space<vmem>>) attributes {dimension_semantics = [#tpu.dimension_semantics<parallel>], iteration_bounds = array<i64: 1>, scalar_prefetch = 0 : i64, scratch_operands = 0 : i64, tpu.core_type = #tpu.core_type<tc>, window_params = [{transform_indices = @transform_0, window_bounds = array<i64: 8, 16>}, {pipeline_mode = #tpu.pipeline_mode<synchronous>, transform_indices = @transform_1, window_bounds = array<i64: 16, 32>}, {pipeline_mode = #tpu.pipeline_mode<synchronous>, transform_indices = @transform_2, window_bounds = array<i64: 1, 32>}, {pipeline_mode = #tpu.pipeline_mode<synchronous>, transform_indices = @transform_3, window_bounds = array<i64: 1, 32>}, {pipeline_mode = #tpu.pipeline_mode<synchronous>, transform_indices = @transform_4, window_bounds = array<i64: 1, 1>}, {transform_indices = @transform_5, window_bounds = array<i64: 1, 8>}]} {
    %c0 = arith.constant 0 : index
    %c0_0 = arith.constant 0 : index
    %0 = vector.load %arg1[%c0, %c0_0] : memref<8x16xf32, #tpu.memory_space<vmem>>, vector<8x16xf32>
    %c0_1 = arith.constant 0 : index
    %c0_2 = arith.constant 0 : index
    %1 = vector.load %arg2[%c0_1, %c0_2] : memref<16x32xf32, #tpu.memory_space<vmem>>, vector<16x32xf32>
    %cst = arith.constant dense<0.000000e+00> : vector<8x32xf32>
    %2 = tpu.matmul %0, %1, %cst {dimension_numbers = #tpu.dot_dimension_numbers<[1], [0], [0], [1], [0, 0, 1, 1], [], []>} : vector<8x16xf32>, vector<16x32xf32>, vector<8x32xf32> -> vector<8x32xf32>
    %c0_3 = arith.constant 0 : index
    %c0_4 = arith.constant 0 : index
    %3 = vector.load %arg3[%c0_3, %c0_4] : memref<1x32xf32, #tpu.memory_space<vmem>>, vector<1x32xf32>
    %4 = vector.broadcast %3 : vector<1x32xf32> to vector<8x32xf32>
    %5 = arith.addf %2, %4 : vector<8x32xf32>
    %cst_5 = arith.constant 0.000000e+00 : f32
    %6 = vector.broadcast %cst_5 : f32 to vector<8x32xf32>
    %7 = arith.maximumf %5, %6 : vector<8x32xf32>
    %c0_6 = arith.constant 0 : index
    %c0_7 = arith.constant 0 : index
    %8 = vector.load %arg4[%c0_6, %c0_7] : memref<1x32xf32, #tpu.memory_space<vmem>>, vector<1x32xf32>
    %cst_8 = arith.constant dense<0.000000e+00> : vector<1x8xf32>
    %9 = tpu.matmul %8, %7, %cst_8 {dimension_numbers = #tpu.dot_dimension_numbers<[1], [1], [0], [0], [0, 0, 1, 0], [], []>} : vector<1x32xf32>, vector<8x32xf32>, vector<1x8xf32> -> vector<1x8xf32>
    %c0_9 = arith.constant 0 : index
    %c0_10 = arith.constant 0 : index
    %10 = vector.load %arg5[%c0_9, %c0_10] : memref<1x1xf32, #tpu.memory_space<vmem>>, vector<1x1xf32>
    %11 = vector.broadcast %10 : vector<1x1xf32> to vector<1x8xf32>
    %12 = arith.addf %9, %11 : vector<1x8xf32>
    %13 = arith.negf %12 : vector<1x8xf32>
    %14 = math.exp %13 : vector<1x8xf32>
    %cst_11 = arith.constant 1.000000e+00 : f32
    %15 = vector.broadcast %cst_11 : f32 to vector<1x8xf32>
    %16 = arith.addf %15, %14 : vector<1x8xf32>
    %17 = arith.divf %15, %16 : vector<1x8xf32>
    %c0_12 = arith.constant 0 : index
    %c0_13 = arith.constant 0 : index
    %18 = vector.load %arg6[%c0_12, %c0_13] : memref<1x8xf32, #tpu.memory_space<vmem>>, vector<1x8xf32>
    tpu.vector_store %arg6[%c0_12, %c0_13], %17 {strides = array<i32>} : memref<1x8xf32, #tpu.memory_space<vmem>>, vector<1x8xf32>,
    return
  }
  func.func @transform_0(%arg0: i32) -> (i32, i32) {
    %c0_i32 = arith.constant 0 : i32
    %c0_i32_0 = arith.constant 0 : i32
    return %arg0, %c0_i32 : i32, i32
  }
  func.func @transform_1(%arg0: i32) -> (i32, i32) {
    %c0_i32 = arith.constant 0 : i32
    %c0_i32_0 = arith.constant 0 : i32
    %c0_i32_1 = arith.constant 0 : i32
    return %c0_i32, %c0_i32_0 : i32, i32
  }
  func.func @transform_2(%arg0: i32) -> (i32, i32) {
    %c0_i32 = arith.constant 0 : i32
    %c0_i32_0 = arith.constant 0 : i32
    %c0_i32_1 = arith.constant 0 : i32
    return %c0_i32, %c0_i32_0 : i32, i32
  }
  func.func @transform_3(%arg0: i32) -> (i32, i32) {
    %c0_i32 = arith.constant 0 : i32
    %c0_i32_0 = arith.constant 0 : i32
    %c0_i32_1 = arith.constant 0 : i32
    return %c0_i32, %c0_i32_0 : i32, i32
  }
  func.func @transform_4(%arg0: i32) -> (i32, i32) {
    %c0_i32 = arith.constant 0 : i32
    %c0_i32_0 = arith.constant 0 : i32
    %c0_i32_1 = arith.constant 0 : i32
    return %c0_i32, %c0_i32_0 : i32, i32
  }
  func.func @transform_5(%arg0: i32) -> (i32, i32) {
    %c0_i32 = arith.constant 0 : i32
    %c0_i32_0 = arith.constant 0 : i32
    return %c0_i32, %arg0 : i32, i32
  }
}

</mosaic_0001>

<llo_original>
// kernel: tpu_custom_call.1
$region0: #{tpu_custom_call.1}
  #allocation0 [shape = 'u32[]', space=smem, size = 0x4, offset = 0x4, fixed_abs, tag = 'smem constant byte address 0x4 - core index']
  #allocation1 [shape = 'u32[72,128]{1,0:T(1,128)}', space=vmem, size = 0x9000, scoped, tag = 'internal scratch']
  #allocation2 [shape = 'f32[1,1]{1,0:T(1,128)S(1)}', space=vmem, size = 0x200, scoped, tag = 'scoped memory for tpu_custom_call.1']
  %s0 = inlined_call_operand.hbm [shape: f32[8,16], index: 0, kind: input, shape index: {}]
  %s1 = inlined_call_operand.hbm [shape: f32[16,32], index: 1, kind: input, shape index: {}]
  %s2 = inlined_call_operand.vmem [shape: f32[1,32], index: 2, kind: input, shape index: {}]
  %s3 = inlined_call_operand.vmem [shape: f32[1,32], index: 3, kind: input, shape index: {}]
  %s4 = inlined_call_operand.<no memory space> [shape: f32[1,1], index: 4, kind: input, shape index: {}]
  %s5 = inlined_call_operand.hbm [shape: f32[1,8], index: 5, kind: output, shape index: {}]
  %s6 = sld [smem:[#allocation0]]
  $region38: #{tpu_custom_call.1} parent=0
    _
  %s8 = ssub.s32 1, %s6
  %s9 = scalar_select 0, %s8, %s6
  %v10 = vstv %s4
  %11 = vst [vmem:[#allocation2] sm:$0x1] %v10
  $region1: #{tpu_custom_call.1} parent=0
    #allocation3 [shape = 'u8[4096]{0}', space=vmem, size = 0x1000, scoped, tag = 'input window, operand 0, single buffered']
    #allocation4 [shape = 's32[1]{0}', space=sflag, size = 0x4, scoped, tag = 'scoped memory for tpu_custom_call.1']
    #allocation5 [shape = 's32[1]{0}', space=sflag, size = 0x4, scoped, tag = 'scoped memory for tpu_custom_call.1']
    #allocation6 [shape = 'u8[8192]{0}', space=vmem, size = 0x2000, scoped, tag = 'input window, operand 1, single buffered']
    #allocation7 [shape = 's32[1]{0}', space=sflag, size = 0x4, scoped, tag = 'scoped memory for tpu_custom_call.1']
    #allocation8 [shape = 'u8[512]{0}', space=vmem, size = 0x400, scoped, tag = 'output window, operand 0, single buffered']
    %12 = vsyncpa [#allocation4], 0
    %13 = vsyncpa [#allocation7], 0
    %14 = vsyncpa [#allocation5], 0
    // Predicated region
    $region2: #{tpu_custom_call.1} parent=1 // pred_check
      _
    $region3: #{tpu_custom_call.1} parent=1 // pred_check_branch
      %16 = sbr.rel (0) target = $region5
    $region4: #{tpu_custom_call.1} parent=1 // pred_region
      %18 = vsyncadd [#allocation4], 0
      %s20 = sshll.u32 %s0, 4
      %s21 = int_to_ptr.hbm [resolvable:$true] %s20
      %s22 = sshll.u32 [#allocation3], 4
      %s23 = int_to_ptr.vmem [resolvable:$true] %s22
      %25 = dma.hbm_to_vmem [thread:$0]  %s21, 128, %s23, [#allocation4]
    $region5: #{tpu_custom_call.1} parent=1 // pred_fallthru
      _
    // Predicated region
    $region6: #{tpu_custom_call.1} parent=1 // pred_check
      _
    $region7: #{tpu_custom_call.1} parent=1 // pred_check_branch
      %27 = sbr.rel (0) target = $region9
    $region8: #{tpu_custom_call.1} parent=1 // pred_region
      %29 = vsyncadd [#allocation7], 0
      %s30 = sshll.u32 %s1, 4
      %s31 = int_to_ptr.hbm [resolvable:$true] %s30
      %s32 = sshll.u32 [#allocation6], 4
      %s33 = int_to_ptr.vmem [resolvable:$true] %s32
      %38 = dma.hbm_to_vmem [thread:$0]  %s31, 256, %s33, [#allocation7], 128, 128, 8
    $region9: #{tpu_custom_call.1} parent=1 // pred_fallthru
      _
    // Predicated region
    $region10: #{tpu_custom_call.1} parent=1 // pred_check
      _
    $region11: #{tpu_custom_call.1} parent=1 // pred_check_branch
      %40 = sbr.rel (0) target = $region13
    $region12: #{tpu_custom_call.1} parent=1 // pred_region
      _
    $region13: #{tpu_custom_call.1} parent=1 // pred_fallthru
      _
    // Predicated region
    $region14: #{tpu_custom_call.1} parent=1 // pred_check
      _
    $region15: #{tpu_custom_call.1} parent=1 // pred_check_branch
      %42 = sbr.rel (0) target = $region17
    $region16: #{tpu_custom_call.1} parent=1 // pred_region
      _
    $region17: #{tpu_custom_call.1} parent=1 // pred_fallthru
      _
    // Predicated region
    $region18: #{tpu_custom_call.1} parent=1 // pred_check
      _
    $region19: #{tpu_custom_call.1} parent=1 // pred_check_branch
      %44 = sbr.rel (0) target = $region21
    $region20: #{tpu_custom_call.1} parent=1 // pred_region
      _
    $region21: #{tpu_custom_call.1} parent=1 // pred_fallthru
      _
    // Predicated region
    $region22: #{tpu_custom_call.1} parent=1 // pred_check
      _
    $region23: #{tpu_custom_call.1} parent=1 // pred_check_branch
      %46 = sbr.rel (0) target = $region25
    $region24: #{tpu_custom_call.1} parent=1 // pred_region
      %48 = dma.done [#allocation4], 128
    $region25: #{tpu_custom_call.1} parent=1 // pred_fallthru
      _
    // Predicated region
    $region26: #{tpu_custom_call.1} parent=1 // pred_check
      _
    $region27: #{tpu_custom_call.1} parent=1 // pred_check_branch
      %50 = sbr.rel (0) target = $region29
    $region28: #{tpu_custom_call.1} parent=1 // pred_region
      %52 = dma.done [#allocation7], 256
    $region29: #{tpu_custom_call.1} parent=1 // pred_fallthru
      _
    %v53 = vld [vmem:[#allocation3] sm:$0xff]
    %v54 = vld [vmem:[#allocation6] sm:$0xff]
    %v55 = vld [vmem:[#allocation6 + $0x8] sm:$0xff]
    %v56 = vld [vmem:[%s2] sm:$0x1]
    %v58 = vperm.slane %v56, 0
    %vm60 = vcmask 130048
    %v62 = vsel %vm60, %v53, 0
    %64 = vmatpush.msra.mxu0 0.0
    %65 = vmatpush.msra.mxu0 0.0
    %66 = vmatpush.msra.mxu0 0.0
    %67 = vmatpush.msra.mxu0 0.0
    %68 = vmatpush.msra.mxu0 0.0
    %69 = vmatpush.msra.mxu0 0.0
    %70 = vmatpush.msra.mxu0 0.0
    %71 = vmatpush.msra.mxu0 0.0
    %72 = vmatpush.msra.mxu0 0.0
    %73 = vmatpush.msra.mxu0 0.0
    %74 = vmatpush.msra.mxu0 0.0
    %75 = vmatpush.msra.mxu0 0.0
    %76 = vmatpush.msra.mxu0 0.0
    %77 = vmatpush.msra.mxu0 0.0
    %78 = vmatpush.msra.mxu0 %v55
    %79 = vmatpush.msra.mxu0 %v54
    %80 = vmatmul.f32.gmra.mxu0 %v62
    %v81 = vpop.f32.mrf.mxu0
    %v82 = vadd.f32 %v58, %v81
    %83 = vdwg.mxu0
    %v84 = vmax.f32 %v82, 0.0
    %v85 = vld [vmem:[%s3] sm:$0x1]
    %v86 = vld [vmem:[#allocation2] sm:$0x1]
    %88 = vset.pattern.permute.xlu0 0
    %89 = vperm.xlu0 %88, %v86
    %v90 = vpop.permute.xlu0 %89
    %v92 = vperm.slane %v90, 0
    %vm93 = vcmask 261120
    %v95 = vsel %vm93, %v85, 0
    %v98 = vsel %vm93, %v84, 0
    %100 = vmatpush.xpose.msra.mxu0 0.0
    %101 = vmatpush.xpose.msra.mxu0 0.0
    %102 = vmatpush.xpose.msra.mxu0 0.0
    %103 = vmatpush.xpose.msra.mxu0 0.0
    %104 = vmatpush.xpose.msra.mxu0 0.0
    %105 = vmatpush.xpose.msra.mxu0 0.0
    %106 = vmatpush.xpose.msra.mxu0 0.0
    %107 = vmatpush.xpose.msra.mxu0 0.0
    %108 = vmatpush.xpose.msra.mxu0 0.0
    %109 = vmatpush.xpose.msra.mxu0 0.0
    %110 = vmatpush.xpose.msra.mxu0 0.0
    %111 = vmatpush.xpose.msra.mxu0 0.0
    %112 = vmatpush.xpose.msra.mxu0 0.0
    %113 = vmatpush.xpose.msra.mxu0 0.0
    %114 = vmatpush.xpose.msra.mxu0 0.0
    %115 = vmatpush.xpose.msra.mxu0 %v98
    %116 = vmatmul.f32.gmra.mxu0 %v95
    %v117 = vpop.f32.mrf.mxu0
    %v118 = vadd.f32 %v92, %v117
    %119 = vdwg.mxu0
    %v120 = vxor.u32 %v118, 2147483648
    %v121 = vmul.f32 %v120, 1.442695
    %v122 = vpow.pop %v121
    %v123 = vadd.f32 %v122, 1.0
    %v124 = vrcp.pop %v123
    %v125 = vmul.f32 %v123, %v124
    %v126 = vsub.f32 1.0, %v125
    %v127 = vmul.f32 %v124, %v126
    %v128 = vadd.f32 %v124, %v127
    %vm129 = vweird.f32 %v123
    %vm130 = vweird.f32 %v124
    %vm131 = vmor %vm129, %vm130
    %v132 = vsel %vm131, %v124, %v128
    %v133 = vand.u32 2147483647, %v123
    %vm134 = vcmp.eq.f32.partialorder %v133, 8.507059e+37
    %v135 = vand.u32 %v123, 2147483648
    %v136 = vor.u32 1.1754944e-38, %v135
    %v137 = vsel %vm134, %v136, %v132
    %v138 = vmul.f32 1.0, %v137
    %vm139 = vcmask 57344
    %140 = vst.msk [vmem:[#allocation8] sm:$0x1] %vm139, %v138
    // Predicated region
    $region30: #{tpu_custom_call.1} parent=1 // pred_check
      _
    $region31: #{tpu_custom_call.1} parent=1 // pred_check_branch
      %142 = sbr.rel (0) target = $region33
    $region32: #{tpu_custom_call.1} parent=1 // pred_region
      %144 = vsyncadd [#allocation5], 0
      %s146 = sshll.u32 [#allocation8], 4
      %s147 = int_to_ptr.vmem [resolvable:$true] %s146
      %s148 = sshll.u32 %s5, 4
      %s149 = int_to_ptr.hbm [resolvable:$true] %s148
      %151 = dma.vmem_to_hbm [thread:$0]  %s147, 16, %s149, [#allocation5]
    $region33: #{tpu_custom_call.1} parent=1 // pred_fallthru
      _
    // Predicated region
    $region34: #{tpu_custom_call.1} parent=1 // pred_check
      _
    $region35: #{tpu_custom_call.1} parent=1 // pred_check_branch
      %153 = sbr.rel (0) target = $region37
    $region36: #{tpu_custom_call.1} parent=1 // pred_region
      %155 = dma.done [#allocation5], 16
    $region37: #{tpu_custom_call.1} parent=1 // pred_fallthru
      _
    %156 = vsyncpa [#allocation4], 1
    %157 = vsyncpa [#allocation7], 1
    %158 = vsyncpa [#allocation5], 1

</llo_original>
